<compile_context>
chip_gen: v5e
topology: v5e:2x2
jax: 0.10.0
libtpu: 0.0.40
codegen_flags: <defaults>
</compile_context>

<pallas_src>
import functools

import jax
import jax.numpy as jnp
from jax.experimental import pallas as pl
from jax.experimental.pallas import tpu as pltpu


# ---------------------------------------------------------------------------
# Kernel 1: pooling partial sums (HBM-bandwidth bound; this is the runtime).
# ---------------------------------------------------------------------------
def _pool_sum_kernel(x_ref, part_ref):
    # x_ref:    (B*C, TL)      lane-dense slab of flattened spatial positions
    # part_ref: (1, B*C, 1)    this chunk's partial sum; resident across steps
    @pl.when(pl.program_id(1) == 0)
    def _():
        part_ref[...] = jnp.zeros_like(part_ref)

    part_ref[...] += jnp.sum(
        x_ref[...].astype(jnp.float32), axis=-1, keepdims=True)[None]


# ---------------------------------------------------------------------------
# Kernel 2: combine chunks -> mean -> Linear(C,128) -> ReLU -> Linear(128,K).
# ---------------------------------------------------------------------------
def _head_kernel(p_ref, w1_ref, b1_ref, w2_ref, b2_ref, o_ref, *, inv_hw):
    pooled = jnp.sum(p_ref[...], axis=0) * inv_hw                       # (B, C)
    h = jnp.dot(pooled, w1_ref[...],
                preferred_element_type=jnp.float32) + b1_ref[...]       # Linear(C -> 128)
    h = jnp.maximum(h, 0.0)                                             # ReLU
    o = jnp.dot(h, w2_ref[...],
                preferred_element_type=jnp.float32) + b2_ref[...]       # Linear(128 -> K)
    o_ref[...] = o.astype(o_ref.dtype)


def _vmem_plan():
    """(input-block byte budget, vmem_limit_bytes) per TPU generation."""
    try:
        cap = pltpu.get_tpu_info().vmem_capacity_bytes
    except Exception:
        cap = 128 * 1024 * 1024
    if cap <= 80 * 1024 * 1024:        # v7x-class: 64 MiB VMEM per TensorCore
        return 4 * 1024 * 1024, 40 * 1024 * 1024
    return 8 * 1024 * 1024, 64 * 1024 * 1024   # v5e / v6e: 128 MiB VMEM


def _spatial_tiling(bc, hw, itemsize, budget):
    """Pick (n_chunks, n_steps, TL, hw_pad) for streaming (bc, hw) rows."""
    bc_pad = (bc + 7) // 8 * 8                          # VMEM sublane padding
    cap_lanes = max(128, (budget // (bc_pad * itemsize)) // 128 * 128)
    cap128 = max(1, cap_lanes // 128)

    if hw % 128 == 0:
        m = hw // 128                                   # number of 128-lane tiles
        n_chunks = 2 if (m >= 2 and m % 2 == 0) else 1  # feeds both v7x TCs
        m_chunk = m // n_chunks
        d = 1
        for cand in range(min(m_chunk, cap128), 0, -1):  # largest divisor <= cap
            if m_chunk % cand == 0:
                d = cand
                break
        return n_chunks, m_chunk // d, 128 * d, hw

    if hw * bc_pad * itemsize <= budget:
        # Unaligned but fits the budget: single full-extent block, no padding.
        return 1, 1, hw, hw

    # Rare: large and not 128-aligned -> zero-pad spatial axis (extra HBM copy,
    # but keeps every block within the VMEM budget on all generations).
    n_chunks = 2
    m_chunk = -(-hw // (128 * n_chunks))
    n_steps = -(-m_chunk // cap128)
    d = -(-m_chunk // n_steps)
    return n_chunks, n_steps, 128 * d, n_chunks * n_steps * 128 * d


def regression_head(x_nchw, w1, b1, w2, b2):
    """Forward pass matching the PyTorch RegressionHead.

    x_nchw: (B, C, H, W)          w1: (128, C)   b1: (128,)
    w2: (K, 128)                  b2: (K,)       returns (B, K)
    """
    B, C, H, W = x_nchw.shape
    H1 = w1.shape[0]
    K = w2.shape[0]
    HW = H * W
    BC = B * C
    itemsize = x_nchw.dtype.itemsize

    budget, vmem_limit = _vmem_plan()
    n_chunks, n_steps, TL, hw_pad = _spatial_tiling(BC, HW, itemsize, budget)

    # NCHW is already channel-major: merging B*C onto sublanes and flattened
    # spatial onto lanes is a pure reshape (no HBM transpose).
    x_rows = x_nchw.reshape(BC, HW)
    if hw_pad != HW:
        x_rows = jnp.pad(x_rows, ((0, 0), (0, hw_pad - HW)))

    cost = pl.CostEstimate(
        flops=2 * BC * HW + 2 * B * C * H1 + 2 * B * H1 * K,
        transcendentals=0,
        bytes_accessed=int(x_rows.size) * itemsize + n_chunks * BC * 4)

    partials = pl.pallas_call(
        _pool_sum_kernel,
        out_shape=jax.ShapeDtypeStruct((n_chunks, BC, 1), jnp.float32),
        grid_spec=pltpu.PrefetchScalarGridSpec(
            num_scalar_prefetch=0,
            grid=(n_chunks, n_steps),                       # (chunk, step)
            in_specs=[pl.BlockSpec((BC, TL),
                                   lambda c, s: (0, c * n_steps + s))],
            out_specs=pl.BlockSpec((1, BC, 1), lambda c, s: (c, 0, 0)),
        ),
        compiler_params=pltpu.CompilerParams(
            dimension_semantics=("parallel", "arbitrary"),  # chunks shard v7x TCs
            vmem_limit_bytes=vmem_limit,
        ),
        cost_estimate=cost,
    )(x_rows)

    # Layout plumbing only (n_chunks*B*C floats): present the partial sums as
    # (n_chunks, B, C) so the head kernel's chunk-combine is a plain reduce.
    partials = partials.reshape(n_chunks, B, C)

    # Weights in (in, out) layout for the in-kernel MXU matmuls.
    w1_mat = jnp.transpose(w1)          # (C, H1)
    b1_mat = b1.reshape(1, H1)
    w2_mat = jnp.transpose(w2)          # (H1, K)
    b2_mat = b2.reshape(1, K)

    out = pl.pallas_call(
        functools.partial(_head_kernel, inv_hw=1.0 / HW),
        out_shape=jax.ShapeDtypeStruct((B, K), x_nchw.dtype),
    )(partials, w1_mat, b1_mat, w2_mat, b2_mat)
    return out


if __name__ == "__main__":
    # Small shapes consistent with the module: in_channels=4, num_keypoints=2.
    B, C, H, W = 2, 4, 16, 16
    H1, K = 128, 2

    key = jax.random.PRNGKey(0)
    kx, k1, k2, k3, k4 = jax.random.split(key, 5)

    x = jax.random.normal(kx, (B, C, H, W), jnp.float32)
    # Deterministic synthetic parameters (PyTorch [out, in] layout).
    w1 = jax.random.normal(k1, (H1, C), jnp.float32) * 0.1
    b1 = jax.random.normal(k2, (H1,), jnp.float32) * 0.1
    w2 = jax.random.normal(k3, (K, H1), jnp.float32) * 0.05
    b2 = jax.random.normal(k4, (K,), jnp.float32) * 0.1

    out = regression_head(x, w1, b1, w2, b2)
    out = jax.block_until_ready(out)
    assert out.shape == (B, K), out.shape

    # Pure-JAX reference (same semantics as the PyTorch module).
    pooled = jnp.mean(x, axis=(2, 3))                    # AdaptiveAvgPool2d(1)+Flatten
    h_ref = jnp.maximum(pooled @ w1.T + b1, 0.0)         # Linear + ReLU
    ref = h_ref @ w2.T + b2                              # Linear (no activation)

    assert jnp.allclose(out, ref, atol=1e-5, rtol=1e-5), float(
        jnp.max(jnp.abs(out - ref)))
    print("KERNEL_OK")
</pallas_src>

<mosaic_0001>
module attributes {stable_mosaic.version = 11 : i64} {
  func.func @_pool_sum_kernel(%arg0: i32, %arg1: i32, %arg2: memref<8x128xf32, #tpu.memory_space<vmem>>, %arg3: memref<1x8x1xf32, #tpu.memory_space<vmem>>) attributes {dimension_semantics = [#tpu.dimension_semantics<parallel>, #tpu.dimension_semantics<arbitrary>], iteration_bounds = array<i64: 2, 1>, scalar_prefetch = 0 : i64, scratch_operands = 0 : i64, tpu.core_type = #tpu.core_type<tc>, window_params = [{transform_indices = @transform_0, window_bounds = array<i64: 8, 128>}, {transform_indices = @transform_1, window_bounds = array<i64: 1, 8, 1>}]} {
    %c0_i32 = arith.constant 0 : i32
    %0 = arith.cmpi eq, %arg1, %c0_i32 : i32
    %1 = arith.extui %0 : i1 to i32
    %c0_i32_0 = arith.constant 0 : i32
    %2 = arith.cmpi ne, %1, %c0_i32_0 : i32
    scf.if %2 {
      %cst_8 = arith.constant 0.000000e+00 : f32
      %10 = vector.broadcast %cst_8 : f32 to vector<1x8x1xf32>
      %c0_9 = arith.constant 0 : index
      %c0_10 = arith.constant 0 : index
      %c0_11 = arith.constant 0 : index
      %11 = vector.load %arg3[%c0_9, %c0_10, %c0_11] : memref<1x8x1xf32, #tpu.memory_space<vmem>>, vector<1x8x1xf32>
      tpu.vector_store %arg3[%c0_9, %c0_10, %c0_11], %10 {strides = array<i32>} : memref<1x8x1xf32, #tpu.memory_space<vmem>>, vector<1x8x1xf32>,
    } else {
    }
    %c0 = arith.constant 0 : index
    %c0_1 = arith.constant 0 : index
    %c0_2 = arith.constant 0 : index
    %3 = vector.load %arg3[%c0, %c0_1, %c0_2] : memref<1x8x1xf32, #tpu.memory_space<vmem>>, vector<1x8x1xf32>
    %c0_3 = arith.constant 0 : index
    %c0_4 = arith.constant 0 : index
    %4 = vector.load %arg2[%c0_3, %c0_4] : memref<8x128xf32, #tpu.memory_space<vmem>>, vector<8x128xf32>
    %cst = arith.constant dense<0.000000e+00> : vector<8xf32>
    %5 = vector.multi_reduction <add>, %4, %cst [1] : vector<8x128xf32> to vector<8xf32>
    %6 = vector.shape_cast %5 : vector<8xf32> to vector<8x1xf32>
    %7 = vector.shape_cast %6 : vector<8x1xf32> to vector<1x8x1xf32>
    %8 = arith.addf %3, %7 : vector<1x8x1xf32>
    %c0_5 = arith.constant 0 : index
    %c0_6 = arith.constant 0 : index
    %c0_7 = arith.constant 0 : index
    %9 = vector.load %arg3[%c0_5, %c0_6, %c0_7] : memref<1x8x1xf32, #tpu.memory_space<vmem>>, vector<1x8x1xf32>
    tpu.vector_store %arg3[%c0_5, %c0_6, %c0_7], %8 {strides = array<i32>} : memref<1x8x1xf32, #tpu.memory_space<vmem>>, vector<1x8x1xf32>,
    return
  }
  func.func @transform_0(%arg0: i32, %arg1: i32) -> (i32, i32) {
    %c1_i32 = arith.constant 1 : i32
    %0 = arith.muli %arg0, %c1_i32 : i32
    %1 = arith.addi %0, %arg1 : i32
    %c0_i32 = arith.constant 0 : i32
    %c0_i32_0 = arith.constant 0 : i32
    return %c0_i32, %1 : i32, i32
  }
  func.func @transform_1(%arg0: i32, %arg1: i32) -> (i32, i32, i32) {
    %c0_i32 = arith.constant 0 : i32
    %c0_i32_0 = arith.constant 0 : i32
    %c0_i32_1 = arith.constant 0 : i32
    return %arg0, %c0_i32, %c0_i32_0 : i32, i32, i32
  }
}

</mosaic_0001>

<llo_original>
// kernel: tpu_custom_call.1
$region0: #{tpu_custom_call.1}
  #allocation0 [shape = 'u32[]', space=smem, size = 0x4, offset = 0x4, fixed_abs, tag = 'smem constant byte address 0x4 - core index']
  #allocation1 [shape = 'u32[72,128]{1,0:T(1,128)}', space=vmem, size = 0x9000, scoped, tag = 'internal scratch']
  %s0 = inlined_call_operand.hbm [shape: f32[8,256], index: 0, kind: input, shape index: {}]
  %s1 = inlined_call_operand.vmem [shape: f32[2,8,1], index: 1, kind: output, shape index: {}]
  %s2 = sld [smem:[#allocation0]]
  $region45: #{tpu_custom_call.1} parent=0
    _
  %s4 = ssub.s32 1, %s2
  %s5 = scalar_select 0, %s4, %s2
  $region1: #{tpu_custom_call.1} parent=0
    #allocation2 [shape = 'u8[8192]{0}', space=vmem, size = 0x2000, scoped, tag = 'input window, operand 0']
    #allocation3 [shape = 's32[2]{0}', space=sflag, size = 0x8, scoped, tag = 'scoped memory for tpu_custom_call.1']
    %6 = vsyncpa [#allocation3], 0
    %s7 = scalar_lea.sflag [#allocation3], 1
    %8 = vsyncpa %s7, 0
    loop: start=0, step=1, limit=4
    $region2: #{tpu_custom_call.1} parent=1 // loop_pre_header
      _
    $region3: #{tpu_custom_call.1} parent=1 // loop_header
      %s10 = sphi 0, %s14
      %p11 = scmp.ge.s32.totalorder %s10, 4
      %s17 = sphi 0, %s29
      %s18 = sphi 0, %s25
      %s19 = sphi 0, %s17
      %s20 = sphi 0, %s18
      %s21 = sphi 0, %s19
      %s22 = sphi 0, %s20
      %s34 = sphi 0, %s36
      %s37 = sphi 0, %s34
      %s38 = sphi 0, %s37
      %s54 = sphi 0, %s38
      %s60 = sphi 0, %s62
      %s63 = sphi 0, %s60
      %s64 = sphi 0, %s63
      %s80 = sphi 0, %s64
    $region4: #{tpu_custom_call.1} parent=1 // loop_header_branch
      %13 = sbr.rel (%p11) target = $region8
    $region5: #{tpu_custom_call.1} parent=1 // loop_body
      %s15 = ssub.s32 %s10, 1
      %s16 = ssub.s32 %s10, 2
      %s23 = sadd.s32 1, %s18
      %p24 = scmp.ge.s32.totalorder %s23, 1
      %s25 = scalar_select %p24, 0, %s23
      %s26 = sadd.s32 1, %s17
      %s27 = scalar_select %p24, %s26, %s17
      %p28 = scmp.ge.s32.totalorder %s27, 2
      %s29 = scalar_select %p28, 0, %s27
      %s30 = sadd.s32 %s17, %s18
      %s31 = sadd.s32 %s29, %s25
      %s32 = ssub.s32 %s30, %s31
      %p33 = scmp.eq.s32.totalorder %s32, 0
      %s35 = sadd.s32 %s34, 1
      %s36 = scalar_select %p33, %s34, %s35
      %p39 = pneg %p33
      %p40 = scmp.eq.s32.totalorder %s10, 1
      %p41 = por %p39, %p40
      %p42 = scmp.ne.s32.totalorder %s34, %s37
      %p43 = scmp.eq.s32.totalorder %s10, 0
      %p44 = por %p42, %p43
      %p45 = scmp.ne.s32.totalorder %s34, %s37
      %p46 = scmp.eq.s32.totalorder %s15, 1
      %p47 = por %p45, %p46
      %p48 = scmp.ne.s32.totalorder %s37, %s38
      %p49 = scmp.eq.s32.totalorder %s15, 0
      %p50 = por %p48, %p49
      %p51 = scmp.ne.s32.totalorder %s37, %s38
      %p52 = scmp.eq.s32.totalorder %s16, 1
      %p53 = por %p51, %p52
      %p55 = scmp.ne.s32.totalorder %s38, %s54
      %p56 = scmp.eq.s32.totalorder %s16, 0
      %p57 = por %p55, %p56
      %s58 = ssub.s32 %s17, %s29
      %p59 = scmp.eq.s32.totalorder %s58, 0
      %s61 = sadd.s32 %s60, 1
      %s62 = scalar_select %p59, %s60, %s61
      %p65 = pneg %p59
      %p66 = scmp.eq.s32.totalorder %s10, 1
      %p67 = por %p65, %p66
      %p68 = scmp.ne.s32.totalorder %s60, %s63
      %p69 = scmp.eq.s32.totalorder %s10, 0
      %p70 = por %p68, %p69
      %p71 = scmp.ne.s32.totalorder %s60, %s63
      %p72 = scmp.eq.s32.totalorder %s15, 1
      %p73 = por %p71, %p72
      %p74 = scmp.ne.s32.totalorder %s63, %s64
      %p75 = scmp.eq.s32.totalorder %s15, 0
      %p76 = por %p74, %p75
      %p77 = scmp.ne.s32.totalorder %s63, %s64
      %p78 = scmp.eq.s32.totalorder %s16, 1
      %p79 = por %p77, %p78
      %p81 = scmp.ne.s32.totalorder %s64, %s80
      %p82 = scmp.eq.s32.totalorder %s16, 0
      %p83 = por %p81, %p82
      %p84 = scmp.le.s32.totalorder 1, %s10
      %p85 = scmp.lt.s32.totalorder %s10, 3
      %p86 = pnand %p84, %p85
      %p87 = pneg %p86
      // Predicated region
      $region9: #{tpu_custom_call.1} parent=5 // pred_check
        _
      $region10: #{tpu_custom_call.1} parent=5 // pred_check_branch
        %89 = sbr.rel (%p86) target = $region12
      $region11: #{tpu_custom_call.1} parent=5 // pred_region
        %s90 = ssub.s32 %s10, 1
      $region12: #{tpu_custom_call.1} parent=5 // pred_fallthru
        _
      %p91 = scmp.lt.s32.totalorder %s10, 2
      // Predicated region
      $region13: #{tpu_custom_call.1} parent=5 // pred_check
        %p92 = pneg %p91
      $region14: #{tpu_custom_call.1} parent=5 // pred_check_branch
        %94 = sbr.rel (%p92) target = $region16
      $region15: #{tpu_custom_call.1} parent=5 // pred_region
        // Predicated region
        $region17: #{tpu_custom_call.1} parent=15 // pred_check
          %p95 = pneg %p44
        $region18: #{tpu_custom_call.1} parent=15 // pred_check_branch
          %97 = sbr.rel (%p95) target = $region20
        $region19: #{tpu_custom_call.1} parent=15 // pred_region
          %s98 = sand.u32 %s34, 1
          %s99 = scalar_lea.sflag [#allocation3], %s98
          %s100 = sand.u32 %s34, 1
          %s101 = smul.addr %s100, 8
          %s102 = scalar_lea.vmem [#allocation2], %s101
          %s103 = sadd.s32 %s17, %s18
          %105 = vsyncadd %s99, 0
          %s106 = smul.addr %s103, 8
          %s107 = scalar_lea.hbm %s0, %s106
          %s109 = sshll.u32 %s107, 4
          %s110 = int_to_ptr.hbm [resolvable:$true] %s109
          %s111 = sshll.u32 %s102, 4
          %s112 = int_to_ptr.vmem [resolvable:$true] %s111
          %114 = dma.hbm_to_vmem [thread:$0]  %s110, 128, %s112, %s99
        $region20: #{tpu_custom_call.1} parent=15 // pred_fallthru
          _
      $region16: #{tpu_custom_call.1} parent=5 // pred_fallthru
        _
      %p115 = scmp.le.s32.totalorder 1, %s10
      %p116 = scmp.lt.s32.totalorder %s10, 3
      %p117 = pnand %p115, %p116
      %p118 = pneg %p117
      // Predicated region
      $region21: #{tpu_custom_call.1} parent=5 // pred_check
        _
      $region22: #{tpu_custom_call.1} parent=5 // pred_check_branch
        %120 = sbr.rel (%p117) target = $region24
      $region23: #{tpu_custom_call.1} parent=5 // pred_region
        %s121 = ssub.s32 %s10, 1
        %s122 = sand.u32 %s37, 1
        %s123 = scalar_lea.sflag [#allocation3], %s122
        %s124 = sand.u32 %s37, 1
        %s125 = smul.addr %s124, 8
        %s126 = scalar_lea.vmem [#allocation2], %s125
        // Predicated region
        $region25: #{tpu_custom_call.1} parent=23 // pred_check
          %p127 = pneg %p50
        $region26: #{tpu_custom_call.1} parent=23 // pred_check_branch
          %129 = sbr.rel (%p127) target = $region28
        $region27: #{tpu_custom_call.1} parent=23 // pred_region
          %131 = dma.done %s123, 128
        $region28: #{tpu_custom_call.1} parent=23 // pred_fallthru
          _
        %s132 = sand.u32 %s37, 1
        %s133 = scalar_lea.sflag [#allocation3], %s132
        %s134 = sand.u32 %s37, 1
        %s135 = smul.addr %s134, 8
        %s136 = scalar_lea.vmem [#allocation2], %s135
        %p137 = pneg %p50
        %p138 = pneg %p47
        %p139 = pneg %p76
        %p140 = pneg %p73
        %p141 = scmp.lt.s32.totalorder %s19, 1
        %s142 = scalar_select %p141, %s19, 1
        %s143 = smul.addr %s142, 8
        %s144 = scalar_lea.vmem %s1, %s143
        %s145 = sadd.s32 %s19, %s20
        %p146 = scmp.lt.s32.totalorder %s19, 1
        %s147 = scalar_select %p146, %s19, 1
        %s148 = smul.addr %s147, 8
        %s149 = scalar_lea.vmem %s1, %s148
        %p150 = scmp.eq.s32.totalorder %s20, 0
        // Predicated region
        $region29: #{tpu_custom_call.1} parent=23 // pred_check
          %p151 = pneg %p150
        $region30: #{tpu_custom_call.1} parent=23 // pred_check_branch
          %153 = sbr.rel (%p151) target = $region32
        $region31: #{tpu_custom_call.1} parent=23 // pred_region
          %vm154 = vcmask 7168
          %155 = vst.msk [vmem:[%s149] sm:$0xff] %vm154, 0.0
        $region32: #{tpu_custom_call.1} parent=23 // pred_fallthru
          _
        %v156 = vld [vmem:[%s149] sm:$0xff]
        %v157 = vld [vmem:[%s126] sm:$0xff]
        %158 = vadd.xlane.f32.xlu0 %v157
        %v159 = vpop.xlane.xlu0 %158
        %v160 = vadd.f32 %v156, %v159
        %vm161 = vcmask 7168
        %162 = vst.msk [vmem:[%s149] sm:$0xff] %vm161, %v160
        %p163 = scmp.lt.s32.totalorder %s19, 1
        %s164 = scalar_select %p163, %s19, 1
        %s165 = smul.addr %s164, 8
        %s166 = scalar_lea.vmem %s1, %s165
        // Predicated region
        $region33: #{tpu_custom_call.1} parent=23 // pred_check
          %p167 = pneg %p73
        $region34: #{tpu_custom_call.1} parent=23 // pred_check_branch
          %169 = sbr.rel (%p167) target = $region36
        $region35: #{tpu_custom_call.1} parent=23 // pred_region
          _
        $region36: #{tpu_custom_call.1} parent=23 // pred_fallthru
          _
      $region24: #{tpu_custom_call.1} parent=5 // pred_fallthru
        _
      %p170 = scmp.le.s32.totalorder 2, %s10
      // Predicated region
      $region37: #{tpu_custom_call.1} parent=5 // pred_check
        %p171 = pneg %p170
      $region38: #{tpu_custom_call.1} parent=5 // pred_check_branch
        %173 = sbr.rel (%p171) target = $region40
      $region39: #{tpu_custom_call.1} parent=5 // pred_region
        %s174 = ssub.s32 %s10, 2
        // Predicated region
        $region41: #{tpu_custom_call.1} parent=39 // pred_check
          %p175 = pneg %p79
        $region42: #{tpu_custom_call.1} parent=39 // pred_check_branch
          %177 = sbr.rel (%p175) target = $region44
        $region43: #{tpu_custom_call.1} parent=39 // pred_region
          %p178 = scmp.lt.s32.totalorder %s21, 1
          %s179 = scalar_select %p178, %s21, 1
          %s180 = smul.addr %s179, 8
          %s181 = scalar_lea.vmem %s1, %s180
        $region44: #{tpu_custom_call.1} parent=39 // pred_fallthru
          _
      $region40: #{tpu_custom_call.1} parent=5 // pred_fallthru
        _
    $region6: #{tpu_custom_call.1} parent=1 // loop_footer
      %s14 = sadd.s32 1, %s10
    $region7: #{tpu_custom_call.1} parent=1 // loop_footer_branch
      %9 = sbr.rel target = $region3
    $region8: #{tpu_custom_call.1} parent=1 // loop_exit
      _
    %182 = vsyncpa [#allocation3], 1
    %s183 = scalar_lea.sflag [#allocation3], 1
    %184 = vsyncpa %s183, 1

</llo_original>
